<compile_context>
chip_gen: v6e
topology: v6e:2x2x1
jax: 0.10.0
libtpu: 0.0.40
codegen_flags: <defaults>
</compile_context>

<pallas_src>
import functools

import jax
import jax.numpy as jnp
from jax import lax
from jax.experimental import pallas as pl
from jax.experimental.pallas import tpu as pltpu


def _round_up(x, m):
    return ((x + m - 1) // m) * m


def _vmem_limit_bytes():
    # Generation-aware scoped-VMEM limit: ~75% of capacity, capped below physical
    # VMEM so compiler-internal scratch has headroom (matters on v7x's 64 MiB/TC).
    try:
        cap = pltpu.get_tpu_info().vmem_capacity_bytes
    except Exception:
        cap = 128 * 1024 * 1024
    return int(min(cap * 3 // 4, 96 * 1024 * 1024))


# ----------------------------------------------------------------------------
# Kernel 1: weight standardization (per output channel), run once at __init__.
# torch semantics: mean over (Cin, kH, kW); unbiased std (ddof=1); std += 1e-5.
# ----------------------------------------------------------------------------
def _weight_std_kernel(w_ref, o_ref):
    w = w_ref[...].astype(jnp.float32)                       # (O, K)
    k = w.shape[1]
    mean = jnp.mean(w, axis=1, keepdims=True)
    centered = w - mean
    denom = max(k - 1, 1)
    var = jnp.sum(centered * centered, axis=1, keepdims=True) / denom
    inv_std = 1.0 / (jnp.sqrt(var) + 1e-5)
    o_ref[...] = (centered * inv_std).astype(o_ref.dtype)


def standardize_weight(w_flat):
    O, K = w_flat.shape
    return pl.pallas_call(
        _weight_std_kernel,
        out_shape=jax.ShapeDtypeStruct((O, K), jnp.float32),
    )(w_flat)


# ----------------------------------------------------------------------------
# Shared in-kernel helpers.
# ----------------------------------------------------------------------------
def _shift_rows(v, s):
    """y[r] = v[r + s] for 0 <= r + s < R, else 0 (static integer shift)."""
    if s == 0:
        return v
    z = jnp.zeros((abs(s), v.shape[1]), v.dtype)
    if s > 0:
        return jnp.concatenate([v[s:, :], z], axis=0)
    return jnp.concatenate([z, v[:s, :]], axis=0)


def _gn_scale_bias(accs, gamma, beta, *, channels, groups, eps, total_rows):
    """Fold GroupNorm stats + affine into per-channel (1, O_pad) scale/bias rows.

    accs: list of (rows, O_pad) f32 blocks that jointly cover every spatial position
    of one sample.  Per-channel sums first (cuts vector work by ~rows/G vs masked
    full passes), then per-group reductions on the tiny rows; variance is the
    centered two-pass form.  Lane-padded channels (>= `channels`) end up with
    scale = bias = 0.
    """
    o_pad = gamma.shape[-1]
    cs = channels // groups
    cnt = float(total_rows * cs)
    col = lax.broadcasted_iota(jnp.int32, (1, o_pad), 1)

    ch_sum = accs[0].sum(axis=0, keepdims=True)
    for a in accs[1:]:
        ch_sum = ch_sum + a.sum(axis=0, keepdims=True)
    mean_row = jnp.zeros((1, o_pad), jnp.float32)
    for g in range(groups):
        m = ((col >= g * cs) & (col < (g + 1) * cs)).astype(jnp.float32)
        gsum = jnp.sum(ch_sum * m, axis=1, keepdims=True)
        mean_row = mean_row + (gsum / cnt) * m

    ch_ss = jnp.zeros((1, o_pad), jnp.float32)
    for a in accs:
        d = a - mean_row
        ch_ss = ch_ss + jnp.sum(d * d, axis=0, keepdims=True)
    rstd_row = jnp.zeros((1, o_pad), jnp.float32)
    for g in range(groups):
        m = ((col >= g * cs) & (col < (g + 1) * cs)).astype(jnp.float32)
        gss = jnp.sum(ch_ss * m, axis=1, keepdims=True)
        rstd_row = rstd_row + lax.rsqrt(gss / cnt + eps) * m

    a_row = gamma.astype(jnp.float32) * rstd_row
    b_row = beta.astype(jnp.float32) - mean_row * a_row
    return a_row, b_row


# ----------------------------------------------------------------------------
# Kernel 2 (stage 1): sub-pixel ConvTranspose2d(k=3, s=2, p=1, op=1) + GN + ReLU.
# Per-sample block; output stored as 4 parity planes (a, b) with row r = i*W + j:
#   planes[2a+b, i*W+j, c] = GN(ReLU)(deconv(x))[2i+a, 2j+b, c]
# ----------------------------------------------------------------------------
def _stage1_kernel(jcol_ref, x_ref, wd_ref, g_ref, b_ref, o_ref, *,
                   H, W, cout, groups, eps, relu):
    HW = H * W
    o_pad = wd_ref.shape[-1]
    x = x_ref[0, :, :]                                   # (HW, Cin) bf16
    not_last_col = jcol_ref[...] < (W - 1)               # (HW, 1) bool

    def make_slab(oi, oj):
        v = _shift_rows(x, oi * W + oj)                  # zero-fills the i >= H rows
        if oj:
            v = jnp.where(not_last_col, v, jnp.zeros_like(v))   # j == W-1 rows -> 0
        return v

    slabs = {(oi, oj): make_slab(oi, oj) for oi in (0, 1) for oj in (0, 1)}
    # Sub-pixel tap table for k=3, stride=2, padding=1, output_padding=1:
    # output parity a uses (kernel index kh, input row offset oi); same for columns.
    taps = {0: ((1, 0),), 1: ((2, 0), (0, 1))}
    # TODO(synk): generalize the tap table (and top/left padding) for other odd k.

    accs = []
    for a in (0, 1):
        for b in (0, 1):
            acc = jnp.zeros((HW, o_pad), jnp.float32)
            for kh, oi in taps[a]:
                for kw, oj in taps[b]:
                    acc = acc + lax.dot_general(
                        slabs[(oi, oj)], wd_ref[kh, kw, :, :],
                        dimension_numbers=(((1,), (0,)), ((), ())),
                        preferred_element_type=jnp.float32)
            accs.append(acc)

    a_row, b_row = _gn_scale_bias(accs, g_ref[...], b_ref[...], channels=cout,
                                  groups=groups, eps=eps, total_rows=4 * HW)
    for p in range(4):
        y = accs[p] * a_row + b_row
        if relu:
            y = jnp.maximum(y, 0.0)
        o_ref[0, p, :, :] = y[:, :cout].astype(o_ref.dtype)


def _stage1_call(jcol, x_flat, wd, gamma, beta, *, H, W, cout, groups, eps, relu):
    N, HW, cin = x_flat.shape
    o_pad = wd.shape[-1]
    kern = functools.partial(_stage1_kernel, H=H, W=W, cout=cout,
                             groups=groups, eps=eps, relu=relu)
    return pl.pallas_call(
        kern,
        out_shape=jax.ShapeDtypeStruct((N, 4, HW, cout), jnp.bfloat16),
        grid_spec=pltpu.PrefetchScalarGridSpec(
            num_scalar_prefetch=0,
            grid=(N,),
            in_specs=[
                pl.BlockSpec((HW, 1), lambda n: (0, 0)),               # column index
                pl.BlockSpec((1, HW, cin), lambda n: (n, 0, 0)),       # x (flattened)
                # constant index_map -> DMA'd once per call (effectively resident)
                pl.BlockSpec((3, 3, cin, o_pad), lambda n: (0, 0, 0, 0)),
                pl.BlockSpec((1, o_pad), lambda n: (0, 0)),
                pl.BlockSpec((1, o_pad), lambda n: (0, 0)),
            ],
            out_specs=pl.BlockSpec((1, 4, HW, cout), lambda n: (n, 0, 0, 0)),
        ),
        compiler_params=pltpu.CompilerParams(
            dimension_semantics=("parallel",),
            vmem_limit_bytes=_vmem_limit_bytes(),
        ),
    )(jcol, x_flat, wd, gamma, beta)


# ----------------------------------------------------------------------------
# Kernel 3 (stage 2): WeightStandardizedConv2d(k=3, s=1, p=1) on the (virtual) concat
# of the deconv planes and the x_pre planes, fused with GN + ReLU, all on the parity
# plane layout (no interleaved image is ever materialized).
# ----------------------------------------------------------------------------
def _stage2_kernel(jcol_ref, p1_ref, p2_ref, w_ref, g_ref, b_ref, o_ref, *,
                   H, W, cout, groups, eps, relu):
    HW = H * W
    o_pad = w_ref.shape[-1]
    j = jcol_ref[...]
    not_first_col = j > 0
    not_last_col = j < (W - 1)

    # torch.cat((deconv_out, x_pre), dim=1) done per plane in VMEM.
    planes = [jnp.concatenate([p1_ref[0, p, :, :], p2_ref[0, p, :, :]], axis=-1)
              for p in range(4)]                                  # 4 x (HW, 2C) bf16

    accs = []
    for a in (0, 1):
        for b in (0, 1):
            acc = jnp.zeros((HW, o_pad), jnp.float32)
            for uu in range(3):
                sr = a + uu - 1
                ap = sr % 2
                di = (sr - ap) // 2
                for vv in range(3):
                    sc = b + vv - 1
                    bp = sc % 2
                    dj = (sc - bp) // 2
                    sl = _shift_rows(planes[2 * ap + bp], di * W + dj)
                    if dj == 1:
                        sl = jnp.where(not_last_col, sl, jnp.zeros_like(sl))
                    elif dj == -1:
                        sl = jnp.where(not_first_col, sl, jnp.zeros_like(sl))
                    acc = acc + lax.dot_general(
                        sl, w_ref[uu, vv, :, :],
                        dimension_numbers=(((1,), (0,)), ((), ())),
                        preferred_element_type=jnp.float32)
            accs.append(acc)

    a_row, b_row = _gn_scale_bias(accs, g_ref[...], b_ref[...], channels=cout,
                                  groups=groups, eps=eps, total_rows=4 * HW)
    for p in range(4):
        y = accs[p] * a_row + b_row
        if relu:
            y = jnp.maximum(y, 0.0)
        o_ref[0, p, :, :] = y[:, :cout].astype(o_ref.dtype)


def _stage2_call(jcol, planes1, planes_pre, w2, gamma, beta, *,
                 H, W, cout, groups, eps, relu):
    N = planes1.shape[0]
    HW = H * W
    o_pad = w2.shape[-1]
    cin2 = w2.shape[2]
    kern = functools.partial(_stage2_kernel, H=H, W=W, cout=cout,
                             groups=groups, eps=eps, relu=relu)
    return pl.pallas_call(
        kern,
        out_shape=jax.ShapeDtypeStruct((N, 4, HW, cout), jnp.bfloat16),
        grid_spec=pltpu.PrefetchScalarGridSpec(
            num_scalar_prefetch=0,
            grid=(N,),
            in_specs=[
                pl.BlockSpec((HW, 1), lambda n: (0, 0)),
                pl.BlockSpec((1, 4, HW, cout), lambda n: (n, 0, 0, 0)),
                pl.BlockSpec((1, 4, HW, cout), lambda n: (n, 0, 0, 0)),
                pl.BlockSpec((3, 3, cin2, o_pad), lambda n: (0, 0, 0, 0)),
                pl.BlockSpec((1, o_pad), lambda n: (0, 0)),
                pl.BlockSpec((1, o_pad), lambda n: (0, 0)),
            ],
            out_specs=pl.BlockSpec((1, 4, HW, cout), lambda n: (n, 0, 0, 0)),
        ),
        compiler_params=pltpu.CompilerParams(
            dimension_semantics=("parallel",),
            vmem_limit_bytes=_vmem_limit_bytes(),
        ),
    )(jcol, planes1, planes_pre, w2, gamma, beta)


# ----------------------------------------------------------------------------
# Module wrapper
# ----------------------------------------------------------------------------
class DeConv2dFuse:
    """Pallas port of models.module.DeConv2dFuse (forward pass only).

    deconv: ConvTranspose2d(Cin, Cout, 3, stride=2, padding=1, output_padding=1,
                            bias=False) -> GroupNorm(4, Cout) -> ReLU
    concat: cat([deconv_out, x_pre], channel)
    conv:   WeightStandardizedConv2d(2*Cout, Cout, 3, stride=1, padding=1,
                                     bias=False) -> GroupNorm(4, Cout) -> ReLU
    """

    def __init__(self, in_channels, out_channels, kernel_size=3, gn_groups=4,
                 relu=True, key=jax.random.PRNGKey(0)):
        assert kernel_size == 3, "sub-pixel deconv path is implemented for kernel_size=3"
        assert out_channels % gn_groups == 0
        self.in_channels = in_channels
        self.out_channels = out_channels
        self.kernel_size = kernel_size
        self.gn_groups = gn_groups
        self.relu = relu
        k = kernel_size
        kd, kc = jax.random.split(key)
        # deterministic Kaiming-uniform-ish inits (shapes match the torch layers)
        bound_d = 1.0 / float(out_channels * k * k) ** 0.5
        self.w_deconv = jax.random.uniform(
            kd, (in_channels, out_channels, k, k),
            minval=-bound_d, maxval=bound_d, dtype=jnp.float32)
        bound_c = (6.0 / float(2 * out_channels * k * k)) ** 0.5
        self.w_conv = jax.random.uniform(
            kc, (out_channels, 2 * out_channels, k, k),
            minval=-bound_c, maxval=bound_c, dtype=jnp.float32)
        # GroupNorm affine params (torch default init: weight=1, bias=0)
        self.gn1_gamma = jnp.ones((out_channels,), jnp.float32)
        self.gn1_beta = jnp.zeros((out_channels,), jnp.float32)
        self.gn2_gamma = jnp.ones((out_channels,), jnp.float32)
        self.gn2_beta = jnp.zeros((out_channels,), jnp.float32)

        # MXU N-dim lane padding (256-multiples feed v6e/v7x's 256-wide MXU when
        # Cout > 128; 128 is already ideal for small Cout / v5e).
        o_pad = _round_up(out_channels, 256 if out_channels > 128 else 128)
        self.o_pad = o_pad
        padc = o_pad - out_channels

        # --- hoisted weight preprocessing (runs once, not per forward) --------
        # deconv taps, K-major per tap: wd[kh, kw, c_in, o] = w_deconv[c_in, o, kh, kw]
        wd = jnp.transpose(self.w_deconv, (2, 3, 0, 1))
        self._wd = jnp.pad(wd, ((0, 0), (0, 0), (0, 0), (0, padc))).astype(jnp.bfloat16)
        # weight-standardized conv weight (Pallas kernel, once), K-major per tap
        w2s = standardize_weight(self.w_conv.reshape(out_channels, -1))
        w2s = w2s.reshape(out_channels, 2 * out_channels, k, k).transpose(2, 3, 1, 0)
        self._w2 = jnp.pad(w2s, ((0, 0), (0, 0), (0, 0), (0, padc))).astype(jnp.bfloat16)
        # lane-padded GroupNorm affine rows
        self._g1 = jnp.pad(self.gn1_gamma, (0, padc), constant_values=1.0).reshape(1, -1)
        self._b1 = jnp.pad(self.gn1_beta, (0, padc)).reshape(1, -1)
        self._g2 = jnp.pad(self.gn2_gamma, (0, padc), constant_values=1.0).reshape(1, -1)
        self._b2 = jnp.pad(self.gn2_beta, (0, padc)).reshape(1, -1)

    def __call__(self, x_pre, x):
        N, cin, H, W = x.shape
        C, G = self.out_channels, self.gn_groups
        Ho, Wo = 2 * H, 2 * W
        assert x_pre.shape == (N, C, Ho, Wo)
        HW = H * W
        # TODO(synk): tile the spatial (H*W) axis (two-pass GN accumulation) for
        # feature maps whose per-sample working set exceeds the VMEM budget.

        # glue: flatten x to (N, H*W, Cin); x_pre to parity planes (N, 4, H*W, C).
        x_flat = jnp.transpose(x, (0, 2, 3, 1)).reshape(N, HW, cin).astype(jnp.bfloat16)
        xpre_planes = (x_pre.reshape(N, C, H, 2, W, 2)
                       .transpose(0, 3, 5, 2, 4, 1)
                       .reshape(N, 4, HW, C).astype(jnp.bfloat16))
        jcol = (jnp.arange(HW, dtype=jnp.int32) % W).reshape(HW, 1)

        planes1 = _stage1_call(jcol, x_flat, self._wd, self._g1, self._b1,
                               H=H, W=W, cout=C, groups=G, eps=1e-5, relu=self.relu)
        planes2 = _stage2_call(jcol, planes1, xpre_planes, self._w2, self._g2, self._b2,
                               H=H, W=W, cout=C, groups=G, eps=1e-5, relu=self.relu)

        # glue: parity planes -> NCHW (this is the only full-output copy and is the
        # same transpose we would need anyway for the torch interface).
        out = (planes2.reshape(N, 2, 2, H, W, C)
               .transpose(0, 5, 3, 1, 4, 2)
               .reshape(N, C, Ho, Wo))
        return out.astype(jnp.float32)


# ----------------------------------------------------------------------------
# Pure-JAX reference (independent math) for the correctness check.
# ----------------------------------------------------------------------------
def _ref_conv_transpose2d(x, w, stride, padding, output_padding):
    N, Ci, H, W = x.shape
    _, Co, kH, kW = w.shape
    Hout = (H - 1) * stride - 2 * padding + kH + output_padding
    Wout = (W - 1) * stride - 2 * padding + kW + output_padding
    out = jnp.zeros((N, Co, (H - 1) * stride + kH, (W - 1) * stride + kW), jnp.float32)
    for kh in range(kH):
        for kw in range(kW):
            contrib = jnp.einsum('ncij,co->noij', x, w[:, :, kh, kw])
            out = out.at[:, :,
                         kh:kh + (H - 1) * stride + 1:stride,
                         kw:kw + (W - 1) * stride + 1:stride].add(contrib)
    out = jnp.pad(out, ((0, 0), (0, 0), (0, output_padding), (0, output_padding)))
    return out[:, :, padding:padding + Hout, padding:padding + Wout]


def _ref_gn_relu(x, gamma, beta, groups, eps=1e-5, relu=True):
    N, C, H, W = x.shape
    xg = x.reshape(N, groups, (C // groups) * H * W)
    mean = xg.mean(axis=2, keepdims=True)
    var = xg.var(axis=2, keepdims=True)
    xn = ((xg - mean) / jnp.sqrt(var + eps)).reshape(N, C, H, W)
    xn = xn * gamma.reshape(1, C, 1, 1) + beta.reshape(1, C, 1, 1)
    return jnp.maximum(xn, 0.0) if relu else xn


def _ref_ws_conv2d(x, w, stride, padding):
    O = w.shape[0]
    wf = w.reshape(O, -1)
    c = wf - wf.mean(axis=1, keepdims=True)
    std = jnp.std(c, axis=1, keepdims=True, ddof=1) + 1e-5
    w_std = (c / std).reshape(w.shape)
    return lax.conv_general_dilated(
        x, w_std, window_strides=(stride, stride),
        padding=[(padding, padding), (padding, padding)],
        dimension_numbers=("NCHW", "OIHW", "NCHW"))


def _reference_forward(m, x_pre, x):
    y = _ref_conv_transpose2d(x, m.w_deconv, stride=2, padding=1, output_padding=1)
    h, w = x.shape[2], x.shape[3]
    y = y[:, :, :2 * h, :2 * w]
    y = _ref_gn_relu(y, m.gn1_gamma, m.gn1_beta, m.gn_groups, relu=m.relu)
    z = jnp.concatenate([y, x_pre], axis=1)
    z = _ref_ws_conv2d(z, m.w_conv, stride=1, padding=1)
    return _ref_gn_relu(z, m.gn2_gamma, m.gn2_beta, m.gn_groups, relu=m.relu)


if __name__ == "__main__":
    key = jax.random.PRNGKey(0)
    kx, kp, km = jax.random.split(key, 3)

    # Small shapes: batch=2, in_channels=4, out_channels=8, x spatial 8 -> x_pre 16.
    N, Cin, Cout, H, W = 2, 4, 8, 8, 8
    x = jax.random.normal(kx, (N, Cin, H, W), dtype=jnp.float32)
    x_pre = jax.random.normal(kp, (N, Cout, 2 * H, 2 * W), dtype=jnp.float32)

    mod = DeConv2dFuse(Cin, Cout, kernel_size=3, key=km)
    out = jax.block_until_ready(mod(x_pre, x))

    ref = _reference_forward(mod, x_pre, x)
    assert out.shape == ref.shape == (N, Cout, 2 * H, 2 * W)
    err = jnp.abs(out - ref)
    # bf16 MXU data path vs f32 reference: loose max bound, tight mean bound.
    assert float(jnp.max(err)) < 1e-1
    assert float(jnp.mean(err)) < 2.5e-2

    print("KERNEL_OK")
</pallas_src>

<mosaic_0001>
module attributes {stable_mosaic.version = 11 : i64} {
  func.func @_weight_std_kernel(%arg0: memref<8x144xf32, #tpu.memory_space<vmem>>, %arg1: memref<8x144xf32, #tpu.memory_space<vmem>>) attributes {dimension_semantics = [], scalar_prefetch = 0 : i64, scratch_operands = 0 : i64, tpu.core_type = #tpu.core_type<tc>} {
    %c0 = arith.constant 0 : index
    %c0_0 = arith.constant 0 : index
    %0 = vector.load %arg0[%c0, %c0_0] : memref<8x144xf32, #tpu.memory_space<vmem>>, vector<8x144xf32>
    %cst = arith.constant dense<0.000000e+00> : vector<8xf32>
    %1 = vector.multi_reduction <add>, %0, %cst [1] : vector<8x144xf32> to vector<8xf32>
    %2 = vector.shape_cast %1 : vector<8xf32> to vector<8x1xf32>
    %cst_1 = arith.constant 1.440000e+02 : f32
    %3 = vector.broadcast %cst_1 : f32 to vector<8x1xf32>
    %4 = arith.divf %2, %3 : vector<8x1xf32>
    %5 = vector.broadcast %4 : vector<8x1xf32> to vector<8x144xf32>
    %6 = arith.subf %0, %5 : vector<8x144xf32>
    %7 = arith.mulf %6, %6 : vector<8x144xf32>
    %cst_2 = arith.constant dense<0.000000e+00> : vector<8xf32>
    %8 = vector.multi_reduction <add>, %7, %cst_2 [1] : vector<8x144xf32> to vector<8xf32>
    %9 = vector.shape_cast %8 : vector<8xf32> to vector<8x1xf32>
    %cst_3 = arith.constant 1.430000e+02 : f32
    %10 = vector.broadcast %cst_3 : f32 to vector<8x1xf32>
    %11 = arith.divf %9, %10 : vector<8x1xf32>
    %12 = math.sqrt %11 : vector<8x1xf32>
    %cst_4 = arith.constant 9.99999974E-6 : f32
    %13 = vector.broadcast %cst_4 : f32 to vector<8x1xf32>
    %14 = arith.addf %12, %13 : vector<8x1xf32>
    %cst_5 = arith.constant 1.000000e+00 : f32
    %15 = vector.broadcast %cst_5 : f32 to vector<8x1xf32>
    %16 = arith.divf %15, %14 : vector<8x1xf32>
    %17 = vector.broadcast %16 : vector<8x1xf32> to vector<8x144xf32>
    %18 = arith.mulf %6, %17 : vector<8x144xf32>
    %c0_6 = arith.constant 0 : index
    %c0_7 = arith.constant 0 : index
    %19 = vector.load %arg1[%c0_6, %c0_7] : memref<8x144xf32, #tpu.memory_space<vmem>>, vector<8x144xf32>
    tpu.vector_store %arg1[%c0_6, %c0_7], %18 {strides = array<i32>} : memref<8x144xf32, #tpu.memory_space<vmem>>, vector<8x144xf32>,
    return
  }
}

</mosaic_0001>

<llo_original>
// kernel: tpu_custom_call.1
$region0: #{tpu_custom_call.1}
  #allocation0 [shape = 'u32[]', space=smem, size = 0x4, offset = 0x4, fixed_abs, tag = 'smem constant byte address 0x4 - core index']
  #allocation1 [shape = 'u32[144,128]{1,0:T(1,128)}', space=vmem, size = 0x12000, scoped, tag = 'internal scratch']
  %s0 = inlined_call_operand.hbm [shape: f32[8,144], index: 0, kind: input, shape index: {}]
  %s1 = inlined_call_operand.hbm [shape: f32[8,144], index: 1, kind: output, shape index: {}]
  %s2 = sld [smem:[#allocation0]]
  $region18: #{tpu_custom_call.1} parent=0
    _
  %s4 = ssub.s32 1, %s2
  %s5 = scalar_select 0, %s4, %s2
  $region1: #{tpu_custom_call.1} parent=0
    #allocation2 [shape = 'u8[8192]{0}', space=vmem, size = 0x2000, scoped, tag = 'input window, operand 0, single buffered']
    #allocation3 [shape = 's32[1]{0}', space=sflag, size = 0x4, scoped, tag = 'scoped memory for tpu_custom_call.1']
    #allocation4 [shape = 's32[1]{0}', space=sflag, size = 0x4, scoped, tag = 'scoped memory for tpu_custom_call.1']
    #allocation5 [shape = 'u8[8192]{0}', space=vmem, size = 0x2000, scoped, tag = 'output window, operand 0, single buffered']
    %6 = vsyncpa [#allocation3], 0
    %7 = vsyncpa [#allocation4], 0
    // Predicated region
    $region2: #{tpu_custom_call.1} parent=1 // pred_check
      _
    $region3: #{tpu_custom_call.1} parent=1 // pred_check_branch
      %9 = sbr.rel (0) target = $region5
    $region4: #{tpu_custom_call.1} parent=1 // pred_region
      %s11 = ssub.s32 256, 256
      %12 = vsyncadd [#allocation3], %s11
      %s14 = sshll.u32 [#allocation2], 4
      %s15 = int_to_ptr.vmem [resolvable:$true] %s14
      %17 = dma.hbm_to_vmem [thread:$0]  %s0, 256, %s15, [#allocation3]
    $region5: #{tpu_custom_call.1} parent=1 // pred_fallthru
      _
    // Predicated region
    $region6: #{tpu_custom_call.1} parent=1 // pred_check
      _
    $region7: #{tpu_custom_call.1} parent=1 // pred_check_branch
      %19 = sbr.rel (0) target = $region9
    $region8: #{tpu_custom_call.1} parent=1 // pred_region
      %20 = dma.done [#allocation3], 256
    $region9: #{tpu_custom_call.1} parent=1 // pred_fallthru
      _
    %v21 = vld [vmem:[#allocation2] sm:$0xff]
    %v22 = vld [vmem:[#allocation2 + $0x8] sm:$0xff]
    %vm23 = vcmask 130048
    %v24 = vsel %vm23, %v22, 0.0
    %v25 = vadd.f32 %v21, %v24
    %26 = vadd.xlane.f32.xlu0 %v25
    %v27 = vpop.xlane.xlu0 %26
    %v28 = vrcp.pop 144.0
    %v29 = vmul.f32 %v27, %v28
    %v30 = vsub.f32 %v21, %v29
    %v31 = vsub.f32 %v22, %v29
    %v32 = vmul.f32 %v30, %v30
    %v33 = vmul.f32 %v31, %v31
    %v34 = vsel %vm23, %v33, 0.0
    %v35 = vadd.f32 %v32, %v34
    %36 = vadd.xlane.f32.xlu0 %v35
    %v37 = vpop.xlane.xlu0 %36
    %v38 = vrcp.pop 143.0
    %v39 = vmul.f32 %v37, %v38
    %v40 = vrsqrt.pop %v39
    %v41 = vmul.f32 %v39, %v40
    %vm42 = vcmp.eq.f32.partialorder %v39, inf
    %v43 = vsel %vm42, %v39, %v41
    %vm44 = vcmp.eq.f32.partialorder %v39, 0.0
    %v45 = vand.u32 %v39, 2147483648
    %v46 = vsel %vm44, %v45, %v43
    %v47 = vadd.f32 %v46, 1e-05
    %v48 = vrcp.pop %v47
    %v49 = vmul.f32 1.0, %v48
    %v50 = vmul.f32 %v30, %v49
    %v51 = vmul.f32 %v31, %v49
    %52 = vst [vmem:[#allocation5] sm:$0xff] %v50
    %53 = vst.msk [vmem:[#allocation5 + $0x8] sm:$0xff] %vm23, %v51
    // Predicated region
    $region10: #{tpu_custom_call.1} parent=1 // pred_check
      _
    $region11: #{tpu_custom_call.1} parent=1 // pred_check_branch
      %55 = sbr.rel (0) target = $region13
    $region12: #{tpu_custom_call.1} parent=1 // pred_region
      %s57 = ssub.s32 256, 256
      %58 = vsyncadd [#allocation4], %s57
      %s60 = sshll.u32 [#allocation5], 4
      %s61 = int_to_ptr.vmem [resolvable:$true] %s60
      %63 = dma.vmem_to_hbm [thread:$0]  %s61, 256, %s1, [#allocation4]
    $region13: #{tpu_custom_call.1} parent=1 // pred_fallthru
      _
    // Predicated region
    $region14: #{tpu_custom_call.1} parent=1 // pred_check
      _
    $region15: #{tpu_custom_call.1} parent=1 // pred_check_branch
      %65 = sbr.rel (0) target = $region17
    $region16: #{tpu_custom_call.1} parent=1 // pred_region
      %66 = dma.done [#allocation4], 256
    $region17: #{tpu_custom_call.1} parent=1 // pred_fallthru
      _
    %67 = vsyncpa [#allocation3], 1
    %68 = vsyncpa [#allocation4], 1

</llo_original>
